<compile_context>
chip_gen: v5e
topology: v5e:2x2
jax: 0.10.0
libtpu: 0.0.40
codegen_flags: <defaults>
</compile_context>

<pallas_src>
import functools

import jax
import jax.numpy as jnp
from jax.experimental import pallas as pl
from jax.experimental.pallas import tpu as pltpu


def _round_up(x: int, m: int) -> int:
    return ((x + m - 1) // m) * m


# --------------------------------------------------------------------------
# Kernel body (shared by all tiling paths):
#   x block : (tm, K)          w block : (K, tn)
#   b block : (1, tn)          o block : (tm, tn)
# One MXU pass with f32 accumulation, bias add, lane-dense store.
# --------------------------------------------------------------------------
def _head_kernel(x_ref, w_ref, b_ref, o_ref):
    acc = jnp.dot(x_ref[...], w_ref[...], preferred_element_type=jnp.float32)
    o_ref[...] = (acc + b_ref[...]).astype(o_ref.dtype)


# --------------------------------------------------------------------------
# One-time parameter preparation (hoisted out of the per-call path):
# pad num_classes up to a lane-dense multiple of 128.
# --------------------------------------------------------------------------
def prepare_head_params(w, b, *, lane: int = 128):
    """w: (dim_in, num_classes) == projection.weight.T, b: (num_classes,)."""
    K, N = w.shape
    N_pad = _round_up(N, lane)
    w_p = jnp.pad(w, ((0, 0), (0, N_pad - N)))
    b_p = jnp.pad(b.reshape(1, N), ((0, 0), (0, N_pad - N)))
    return w_p, b_p


def _pick_tm(M: int) -> int:
    """Sublane-multiple M tile minimizing padding (ties -> larger tile)."""
    if M <= 128:
        return _round_up(max(M, 1), 8)
    best_tm, best_pad = 128, _round_up(M, 128) - M
    for tm in range(128, 7, -8):
        pad = _round_up(M, tm) - M
        if pad < best_pad:
            best_tm, best_pad = tm, pad
    return best_tm


def _select_tiles(M: int, K: int, N_pad: int):
    """Static tile selection. Returns (tm, tn); tn == N_pad => W resident."""
    bpe = 4  # f32
    M8 = _round_up(max(M, 1), 8)

    # Path A0: whole problem in a single VMEM block -> grid (1,).
    single = bpe * (M8 * K + K * N_pad + N_pad + M8 * N_pad)
    if single <= 8 * 1024 * 1024:
        return M8, N_pad

    # Path A1: full-width, VMEM-resident weight + bias; stream M tiles.
    # Cap at 16 MiB so it is safe even on v7x (64 MiB VMEM / 32 MiB scoped).
    if bpe * K * (N_pad + 1) <= 16 * 1024 * 1024:
        return _pick_tm(M), N_pad

    # Path B: 2-D tiling. Widest lane-dense class tile under a VMEM cap
    # (double-buffered x, w, out tiles + bias).
    tm = _pick_tm(M)
    for tn in (512, 256, 128):
        if N_pad % tn == 0:
            step = bpe * (2 * tm * K + 2 * K * tn + 2 * tm * tn + 2 * tn)
            if step <= 20 * 1024 * 1024:
                return tm, tn
    return tm, 128


# --------------------------------------------------------------------------
# Jitted forward. Takes pre-padded weight/bias so no HBM->HBM weight copy
# happens per call. Only the (small) activations are padded here.
# --------------------------------------------------------------------------
@functools.partial(jax.jit, static_argnames=("num_classes",))
def transformer_basic_head_forward(x, w_p, b_p, *, num_classes: int):
    M, K = x.shape
    Kw, N_pad = w_p.shape
    assert K == Kw, "dim_in mismatch"

    tm, tn = _select_tiles(M, K, N_pad)
    M_pad = _round_up(M, tm)
    x_p = x if M_pad == M else jnp.pad(x, ((0, M_pad - M), (0, 0)))

    gm, gn = M_pad // tm, N_pad // tn

    if tn == N_pad:
        # Path A: full class width per step. Constant index map keeps the
        # weight and bias blocks VMEM-resident across all M tiles, so W is
        # DMA'd from HBM exactly once.
        grid = (gm,)
        in_specs = [
            pl.BlockSpec((tm, K), lambda i: (i, 0)),        # activations
            pl.BlockSpec((K, N_pad), lambda i: (0, 0)),      # weight (resident)
            pl.BlockSpec((1, N_pad), lambda i: (0, 0)),      # bias   (resident)
        ]
        out_spec = pl.BlockSpec((tm, N_pad), lambda i: (i, 0))
        dims = ("parallel",)
        bytes_accessed = 4 * (M_pad * K + K * N_pad + N_pad + M_pad * N_pad)
    else:
        # Path B: weight too large to hold resident. M axis innermost so each
        # (K, tn) weight tile is fetched once and reused across all M tiles
        # (weight is the larger operand); only the small x tiles re-stream.
        grid = (gn, gm)
        in_specs = [
            pl.BlockSpec((tm, K), lambda j, i: (i, 0)),
            pl.BlockSpec((K, tn), lambda j, i: (0, j)),
            pl.BlockSpec((1, tn), lambda j, i: (0, j)),
        ]
        out_spec = pl.BlockSpec((tm, tn), lambda j, i: (i, j))
        dims = ("parallel", "arbitrary")
        bytes_accessed = 4 * (gn * M_pad * K + K * N_pad + N_pad + M_pad * N_pad)

    cost = pl.CostEstimate(
        flops=2 * M_pad * N_pad * K,
        transcendentals=0,
        bytes_accessed=bytes_accessed,
    )

    out_p = pl.pallas_call(
        _head_kernel,
        out_shape=jax.ShapeDtypeStruct((M_pad, N_pad), x.dtype),
        grid=grid,
        in_specs=in_specs,
        out_specs=out_spec,
        compiler_params=pltpu.CompilerParams(dimension_semantics=dims),
        cost_estimate=cost,
    )(x_p, w_p, b_p)

    return out_p[:M, :num_classes]


def transformer_basic_head(x, w, b):
    """Convenience wrapper: pads parameters per call (prefer prepare_head_params
    + transformer_basic_head_forward to keep the pad out of the hot path)."""
    w_p, b_p = prepare_head_params(w, b)
    return transformer_basic_head_forward(x, w_p, b_p, num_classes=b.shape[0])


if __name__ == "__main__":
    # Small shapes consistent with a transformer classification head:
    # batch of 10 clip/token embeddings, dim_in=192, num_classes=400.
    B, DIM_IN, NUM_CLASSES = 10, 192, 400

    key = jax.random.PRNGKey(0)
    kx, kw, kb = jax.random.split(key, 3)
    x = jax.random.normal(kx, (B, DIM_IN), jnp.float32)
    # w is stored as projection.weight.T -> (dim_in, num_classes)
    w = 0.02 * jax.random.normal(kw, (DIM_IN, NUM_CLASSES), jnp.float32)
    b = 0.02 * jax.random.normal(kb, (NUM_CLASSES,), jnp.float32)

    # Pad weights/bias ONCE (init time), then run the jitted forward.
    w_p, b_p = prepare_head_params(w, b)
    out = transformer_basic_head_forward(x, w_p, b_p, num_classes=NUM_CLASSES)
    jax.block_until_ready(out)

    ref = x @ w + b
    assert out.shape == (B, NUM_CLASSES) and out.dtype == jnp.float32
    assert jnp.allclose(out, ref, atol=1e-4, rtol=1e-4)
    print("KERNEL_OK")
</pallas_src>

<mosaic_0001>
module attributes {stable_mosaic.version = 11 : i64} {
  func.func @_head_kernel(%arg0: i32, %arg1: memref<16x192xf32, #tpu.memory_space<vmem>>, %arg2: memref<192x512xf32, #tpu.memory_space<vmem>>, %arg3: memref<1x512xf32, #tpu.memory_space<vmem>>, %arg4: memref<16x512xf32, #tpu.memory_space<vmem>>) attributes {dimension_semantics = [#tpu.dimension_semantics<parallel>], iteration_bounds = array<i64: 1>, scalar_prefetch = 0 : i64, scratch_operands = 0 : i64, tpu.core_type = #tpu.core_type<tc>, window_params = [{transform_indices = @transform_0, window_bounds = array<i64: 16, 192>}, {pipeline_mode = #tpu.pipeline_mode<synchronous>, transform_indices = @transform_1, window_bounds = array<i64: 192, 512>}, {pipeline_mode = #tpu.pipeline_mode<synchronous>, transform_indices = @transform_2, window_bounds = array<i64: 1, 512>}, {transform_indices = @transform_3, window_bounds = array<i64: 16, 512>}]} {
    %c0 = arith.constant 0 : index
    %c0_0 = arith.constant 0 : index
    %0 = vector.load %arg1[%c0, %c0_0] : memref<16x192xf32, #tpu.memory_space<vmem>>, vector<16x192xf32>
    %c0_1 = arith.constant 0 : index
    %c0_2 = arith.constant 0 : index
    %1 = vector.load %arg2[%c0_1, %c0_2] : memref<192x512xf32, #tpu.memory_space<vmem>>, vector<192x512xf32>
    %cst = arith.constant dense<0.000000e+00> : vector<16x512xf32>
    %2 = tpu.matmul %0, %1, %cst {dimension_numbers = #tpu.dot_dimension_numbers<[1], [0], [0], [1], [0, 0, 1, 1], [], []>} : vector<16x192xf32>, vector<192x512xf32>, vector<16x512xf32> -> vector<16x512xf32>
    %c0_3 = arith.constant 0 : index
    %c0_4 = arith.constant 0 : index
    %3 = vector.load %arg3[%c0_3, %c0_4] : memref<1x512xf32, #tpu.memory_space<vmem>>, vector<1x512xf32>
    %4 = vector.broadcast %3 : vector<1x512xf32> to vector<16x512xf32>
    %5 = arith.addf %2, %4 : vector<16x512xf32>
    %c0_5 = arith.constant 0 : index
    %c0_6 = arith.constant 0 : index
    %6 = vector.load %arg4[%c0_5, %c0_6] : memref<16x512xf32, #tpu.memory_space<vmem>>, vector<16x512xf32>
    tpu.vector_store %arg4[%c0_5, %c0_6], %5 {strides = array<i32>} : memref<16x512xf32, #tpu.memory_space<vmem>>, vector<16x512xf32>,
    return
  }
  func.func @transform_0(%arg0: i32) -> (i32, i32) {
    %c0_i32 = arith.constant 0 : i32
    %c0_i32_0 = arith.constant 0 : i32
    return %arg0, %c0_i32 : i32, i32
  }
  func.func @transform_1(%arg0: i32) -> (i32, i32) {
    %c0_i32 = arith.constant 0 : i32
    %c0_i32_0 = arith.constant 0 : i32
    %c0_i32_1 = arith.constant 0 : i32
    return %c0_i32, %c0_i32_0 : i32, i32
  }
  func.func @transform_2(%arg0: i32) -> (i32, i32) {
    %c0_i32 = arith.constant 0 : i32
    %c0_i32_0 = arith.constant 0 : i32
    %c0_i32_1 = arith.constant 0 : i32
    return %c0_i32, %c0_i32_0 : i32, i32
  }
  func.func @transform_3(%arg0: i32) -> (i32, i32) {
    %c0_i32 = arith.constant 0 : i32
    %c0_i32_0 = arith.constant 0 : i32
    return %arg0, %c0_i32 : i32, i32
  }
}

</mosaic_0001>

<llo_original>
// kernel: transformer_basic_head_forward.1
$region0: #{transformer_basic_head_forward.1}
  #allocation0 [shape = 'u32[]', space=smem, size = 0x4, offset = 0x4, fixed_abs, tag = 'smem constant byte address 0x4 - core index']
  #allocation1 [shape = 'u32[72,128]{1,0:T(1,128)}', space=vmem, size = 0x9000, scoped, tag = 'internal scratch']
  %s0 = inlined_call_operand.vmem [shape: f32[16,192], index: 0, kind: input, shape index: {}]
  %s1 = inlined_call_operand.hbm [shape: f32[192,512], index: 1, kind: input, shape index: {}]
  %s2 = inlined_call_operand.vmem [shape: f32[1,512], index: 2, kind: input, shape index: {}]
  %s3 = inlined_call_operand.hbm [shape: f32[16,512], index: 3, kind: output, shape index: {}]
  %s4 = sld [smem:[#allocation0]]
  $region26: #{transformer_basic_head_forward.1} parent=0
    _
  %s6 = ssub.s32 1, %s4
  %s7 = scalar_select 0, %s6, %s4
  $region1: #{transformer_basic_head_forward.1} parent=0
    #allocation2 [shape = 'u8[393216]{0}', space=vmem, size = 0x60000, scoped, tag = 'input window, operand 1, single buffered']
    #allocation3 [shape = 's32[1]{0}', space=sflag, size = 0x4, scoped, tag = 'scoped memory for transformer_basic_head_forward.1']
    #allocation4 [shape = 's32[1]{0}', space=sflag, size = 0x4, scoped, tag = 'scoped memory for transformer_basic_head_forward.1']
    #allocation5 [shape = 'u8[32768]{0}', space=vmem, size = 0x8000, scoped, tag = 'output window, operand 0, single buffered']
    %8 = vsyncpa [#allocation3], 0
    %9 = vsyncpa [#allocation4], 0
    // Predicated region
    $region2: #{transformer_basic_head_forward.1} parent=1 // pred_check
      _
    $region3: #{transformer_basic_head_forward.1} parent=1 // pred_check_branch
      %11 = sbr.rel (0) target = $region5
    $region4: #{transformer_basic_head_forward.1} parent=1 // pred_region
      _
    $region5: #{transformer_basic_head_forward.1} parent=1 // pred_fallthru
      _
    // Predicated region
    $region6: #{transformer_basic_head_forward.1} parent=1 // pred_check
      _
    $region7: #{transformer_basic_head_forward.1} parent=1 // pred_check_branch
      %13 = sbr.rel (0) target = $region9
    $region8: #{transformer_basic_head_forward.1} parent=1 // pred_region
      %15 = vsyncadd [#allocation3], 0
      %s16 = sshll.u32 %s1, 4
      %s17 = int_to_ptr.hbm [resolvable:$true] %s16
      %s18 = sshll.u32 [#allocation2], 4
      %s19 = int_to_ptr.vmem [resolvable:$true] %s18
      %24 = dma.hbm_to_vmem [thread:$0]  %s17, 12288, %s19, [#allocation3], 512, 512, 32
    $region9: #{transformer_basic_head_forward.1} parent=1 // pred_fallthru
      _
    // Predicated region
    $region10: #{transformer_basic_head_forward.1} parent=1 // pred_check
      _
    $region11: #{transformer_basic_head_forward.1} parent=1 // pred_check_branch
      %26 = sbr.rel (0) target = $region13
    $region12: #{transformer_basic_head_forward.1} parent=1 // pred_region
      _
    $region13: #{transformer_basic_head_forward.1} parent=1 // pred_fallthru
      _
    // Predicated region
    $region14: #{transformer_basic_head_forward.1} parent=1 // pred_check
      _
    $region15: #{transformer_basic_head_forward.1} parent=1 // pred_check_branch
      %28 = sbr.rel (0) target = $region17
    $region16: #{transformer_basic_head_forward.1} parent=1 // pred_region
      %30 = dma.done [#allocation3], 12288
    $region17: #{transformer_basic_head_forward.1} parent=1 // pred_fallthru
      _
    %v31 = vld [vmem:[%s0] sm:$0xff]
    %v32 = vld [vmem:[%s0 + $0x8] sm:$0xff]
    %v33 = vld [vmem:[%s0 + $0x10] sm:$0xff]
    %v34 = vld [vmem:[%s0 + $0x18] sm:$0xff]
    %v35 = vld [vmem:[#allocation2] sm:$0xff]
    %v36 = vld [vmem:[#allocation2 + $0x8] sm:$0xff]
    %v37 = vld [vmem:[#allocation2 + $0x10] sm:$0xff]
    %v38 = vld [vmem:[#allocation2 + $0x18] sm:$0xff]
    %v39 = vld [vmem:[#allocation2 + $0x20] sm:$0xff]
    %v40 = vld [vmem:[#allocation2 + $0x28] sm:$0xff]
    %v41 = vld [vmem:[#allocation2 + $0x30] sm:$0xff]
    %v42 = vld [vmem:[#allocation2 + $0x38] sm:$0xff]
    %v43 = vld [vmem:[#allocation2 + $0x40] sm:$0xff]
    %v44 = vld [vmem:[#allocation2 + $0x48] sm:$0xff]
    %v45 = vld [vmem:[#allocation2 + $0x50] sm:$0xff]
    %v46 = vld [vmem:[#allocation2 + $0x58] sm:$0xff]
    %v47 = vld [vmem:[#allocation2 + $0x60] sm:$0xff]
    %v48 = vld [vmem:[#allocation2 + $0x68] sm:$0xff]
    %v49 = vld [vmem:[#allocation2 + $0x70] sm:$0xff]
    %v50 = vld [vmem:[#allocation2 + $0x78] sm:$0xff]
    %v51 = vld [vmem:[#allocation2 + $0x80] sm:$0xff]
    %v52 = vld [vmem:[#allocation2 + $0x88] sm:$0xff]
    %v53 = vld [vmem:[#allocation2 + $0x90] sm:$0xff]
    %v54 = vld [vmem:[#allocation2 + $0x98] sm:$0xff]
    %v55 = vld [vmem:[#allocation2 + $0xa0] sm:$0xff]
    %v56 = vld [vmem:[#allocation2 + $0xa8] sm:$0xff]
    %v57 = vld [vmem:[#allocation2 + $0xb0] sm:$0xff]
    %v58 = vld [vmem:[#allocation2 + $0xb8] sm:$0xff]
    %v59 = vld [vmem:[#allocation2 + $0xc0] sm:$0xff]
    %v60 = vld [vmem:[#allocation2 + $0xc8] sm:$0xff]
    %v61 = vld [vmem:[#allocation2 + $0xd0] sm:$0xff]
    %v62 = vld [vmem:[#allocation2 + $0xd8] sm:$0xff]
    %v63 = vld [vmem:[#allocation2 + $0xe0] sm:$0xff]
    %v64 = vld [vmem:[#allocation2 + $0xe8] sm:$0xff]
    %v65 = vld [vmem:[#allocation2 + $0xf0] sm:$0xff]
    %v66 = vld [vmem:[#allocation2 + $0xf8] sm:$0xff]
    %v67 = vld [vmem:[#allocation2 + $0x100] sm:$0xff]
    %v68 = vld [vmem:[#allocation2 + $0x108] sm:$0xff]
    %v69 = vld [vmem:[#allocation2 + $0x110] sm:$0xff]
    %v70 = vld [vmem:[#allocation2 + $0x118] sm:$0xff]
    %v71 = vld [vmem:[#allocation2 + $0x120] sm:$0xff]
    %v72 = vld [vmem:[#allocation2 + $0x128] sm:$0xff]
    %v73 = vld [vmem:[#allocation2 + $0x130] sm:$0xff]
    %v74 = vld [vmem:[#allocation2 + $0x138] sm:$0xff]
    %v75 = vld [vmem:[#allocation2 + $0x140] sm:$0xff]
    %v76 = vld [vmem:[#allocation2 + $0x148] sm:$0xff]
    %v77 = vld [vmem:[#allocation2 + $0x150] sm:$0xff]
    %v78 = vld [vmem:[#allocation2 + $0x158] sm:$0xff]
    %v79 = vld [vmem:[#allocation2 + $0x160] sm:$0xff]
    %v80 = vld [vmem:[#allocation2 + $0x168] sm:$0xff]
    %v81 = vld [vmem:[#allocation2 + $0x170] sm:$0xff]
    %v82 = vld [vmem:[#allocation2 + $0x178] sm:$0xff]
    %v83 = vld [vmem:[#allocation2 + $0x180] sm:$0xff]
    %v84 = vld [vmem:[#allocation2 + $0x188] sm:$0xff]
    %v85 = vld [vmem:[#allocation2 + $0x190] sm:$0xff]
    %v86 = vld [vmem:[#allocation2 + $0x198] sm:$0xff]
    %v87 = vld [vmem:[#allocation2 + $0x1a0] sm:$0xff]
    %v88 = vld [vmem:[#allocation2 + $0x1a8] sm:$0xff]
    %v89 = vld [vmem:[#allocation2 + $0x1b0] sm:$0xff]
    %v90 = vld [vmem:[#allocation2 + $0x1b8] sm:$0xff]
    %v91 = vld [vmem:[#allocation2 + $0x1c0] sm:$0xff]
    %v92 = vld [vmem:[#allocation2 + $0x1c8] sm:$0xff]
    %v93 = vld [vmem:[#allocation2 + $0x1d0] sm:$0xff]
    %v94 = vld [vmem:[#allocation2 + $0x1d8] sm:$0xff]
    %v95 = vld [vmem:[#allocation2 + $0x1e0] sm:$0xff]
    %v96 = vld [vmem:[#allocation2 + $0x1e8] sm:$0xff]
    %v97 = vld [vmem:[#allocation2 + $0x1f0] sm:$0xff]
    %v98 = vld [vmem:[#allocation2 + $0x1f8] sm:$0xff]
    %v99 = vld [vmem:[#allocation2 + $0x200] sm:$0xff]
    %v100 = vld [vmem:[#allocation2 + $0x208] sm:$0xff]
    %v101 = vld [vmem:[#allocation2 + $0x210] sm:$0xff]
    %v102 = vld [vmem:[#allocation2 + $0x218] sm:$0xff]
    %v103 = vld [vmem:[#allocation2 + $0x220] sm:$0xff]
    %v104 = vld [vmem:[#allocation2 + $0x228] sm:$0xff]
    %v105 = vld [vmem:[#allocation2 + $0x230] sm:$0xff]
    %v106 = vld [vmem:[#allocation2 + $0x238] sm:$0xff]
    %v107 = vld [vmem:[#allocation2 + $0x240] sm:$0xff]
    %v108 = vld [vmem:[#allocation2 + $0x248] sm:$0xff]
    %v109 = vld [vmem:[#allocation2 + $0x250] sm:$0xff]
    %v110 = vld [vmem:[#allocation2 + $0x258] sm:$0xff]
    %v111 = vld [vmem:[#allocation2 + $0x260] sm:$0xff]
    %v112 = vld [vmem:[#allocation2 + $0x268] sm:$0xff]
    %v113 = vld [vmem:[#allocation2 + $0x270] sm:$0xff]
    %v114 = vld [vmem:[#allocation2 + $0x278] sm:$0xff]
    %v115 = vld [vmem:[#allocation2 + $0x280] sm:$0xff]
    %v116 = vld [vmem:[#allocation2 + $0x288] sm:$0xff]
    %v117 = vld [vmem:[#allocation2 + $0x290] sm:$0xff]
    %v118 = vld [vmem:[#allocation2 + $0x298] sm:$0xff]
    %v119 = vld [vmem:[#allocation2 + $0x2a0] sm:$0xff]
    %v120 = vld [vmem:[#allocation2 + $0x2a8] sm:$0xff]
    %v121 = vld [vmem:[#allocation2 + $0x2b0] sm:$0xff]
    %v122 = vld [vmem:[#allocation2 + $0x2b8] sm:$0xff]
    %v123 = vld [vmem:[#allocation2 + $0x2c0] sm:$0xff]
    %v124 = vld [vmem:[#allocation2 + $0x2c8] sm:$0xff]
    %v125 = vld [vmem:[#allocation2 + $0x2d0] sm:$0xff]
    %v126 = vld [vmem:[#allocation2 + $0x2d8] sm:$0xff]
    %v127 = vld [vmem:[#allocation2 + $0x2e0] sm:$0xff]
    %v128 = vld [vmem:[#allocation2 + $0x2e8] sm:$0xff]
    %v129 = vld [vmem:[#allocation2 + $0x2f0] sm:$0xff]
    %v130 = vld [vmem:[#allocation2 + $0x2f8] sm:$0xff]
    %v131 = vld [vmem:[%s2] sm:$0xf]
    %v133 = vperm.slane %v131, 0
    %v134 = vperm.slane %v131, 1
    %v135 = vperm.slane %v131, 2
    %v136 = vperm.slane %v131, 3
    %vm141 = vcmask 523264
    %v143 = vsel %vm141, %v32, 0
    %v146 = vsel %vm141, %v34, 0
    %148 = vmatpush.msra.mxu0 %v95
    %149 = vmatpush.msra.mxu0 %v91
    %150 = vmatpush.msra.mxu0 %v87
    %151 = vmatpush.msra.mxu0 %v83
    %152 = vmatpush.msra.mxu0 %v79
    %153 = vmatpush.msra.mxu0 %v75
    %154 = vmatpush.msra.mxu0 %v71
    %155 = vmatpush.msra.mxu0 %v67
    %156 = vmatpush.msra.mxu0 %v63
    %157 = vmatpush.msra.mxu0 %v59
    %158 = vmatpush.msra.mxu0 %v55
    %159 = vmatpush.msra.mxu0 %v51
    %160 = vmatpush.msra.mxu0 %v47
    %161 = vmatpush.msra.mxu0 %v43
    %162 = vmatpush.msra.mxu0 %v39
    %163 = vmatpush.msra.mxu0 %v35
    %164 = vmatmul.f32.gmra.mxu0 %v31
    %v165 = vpop.f32.mrf.mxu0
    %v166 = vadd.f32 %v133, %v165
    %167 = vmatmul.f32.gmra.mxu0 %v33
    %v168 = vpop.f32.mrf.mxu0
    %v169 = vadd.f32 %v133, %v168
    %170 = vdwg.mxu0
    %171 = vmatpush.msra.mxu0 0.0
    %172 = vmatpush.msra.mxu0 0.0
    %173 = vmatpush.msra.mxu0 0.0
    %174 = vmatpush.msra.mxu0 0.0
    %175 = vmatpush.msra.mxu0 0.0
    %176 = vmatpush.msra.mxu0 0.0
    %177 = vmatpush.msra.mxu0 0.0
    %178 = vmatpush.msra.mxu0 0.0
    %179 = vmatpush.msra.mxu0 %v127
    %180 = vmatpush.msra.mxu0 %v123
    %181 = vmatpush.msra.mxu0 %v119
    %182 = vmatpush.msra.mxu0 %v115
    %183 = vmatpush.msra.mxu0 %v111
    %184 = vmatpush.msra.mxu0 %v107
    %185 = vmatpush.msra.mxu0 %v103
    %186 = vmatpush.msra.mxu0 %v99
    %187 = vmatmul.f32.gmra.mxu0 %v143
    %v188 = vpop.f32.mrf.mxu0
    %v189 = vadd.f32 %v166, %v188
    %190 = vmatmul.f32.gmra.mxu0 %v146
    %v191 = vpop.f32.mrf.mxu0
    %v192 = vadd.f32 %v169, %v191
    %193 = vdwg.mxu0
    %194 = vmatpush.msra.mxu0 %v96
    %195 = vmatpush.msra.mxu0 %v92
    %196 = vmatpush.msra.mxu0 %v88
    %197 = vmatpush.msra.mxu0 %v84
    %198 = vmatpush.msra.mxu0 %v80
    %199 = vmatpush.msra.mxu0 %v76
    %200 = vmatpush.msra.mxu0 %v72
    %201 = vmatpush.msra.mxu0 %v68
    %202 = vmatpush.msra.mxu0 %v64
    %203 = vmatpush.msra.mxu0 %v60
    %204 = vmatpush.msra.mxu0 %v56
    %205 = vmatpush.msra.mxu0 %v52
    %206 = vmatpush.msra.mxu0 %v48
    %207 = vmatpush.msra.mxu0 %v44
    %208 = vmatpush.msra.mxu0 %v40
    %209 = vmatpush.msra.mxu0 %v36
    %210 = vmatmul.f32.gmra.mxu0 %v31
    %v211 = vpop.f32.mrf.mxu0
    %v212 = vadd.f32 %v134, %v211
    %213 = vmatmul.f32.gmra.mxu0 %v33
    %v214 = vpop.f32.mrf.mxu0
    %v215 = vadd.f32 %v134, %v214
    %216 = vdwg.mxu0
    %217 = vmatpush.msra.mxu0 0.0
    %218 = vmatpush.msra.mxu0 0.0
    %219 = vmatpush.msra.mxu0 0.0
    %220 = vmatpush.msra.mxu0 0.0
    %221 = vmatpush.msra.mxu0 0.0
    %222 = vmatpush.msra.mxu0 0.0
    %223 = vmatpush.msra.mxu0 0.0
    %224 = vmatpush.msra.mxu0 0.0
    %225 = vmatpush.msra.mxu0 %v128
    %226 = vmatpush.msra.mxu0 %v124
    %227 = vmatpush.msra.mxu0 %v120
    %228 = vmatpush.msra.mxu0 %v116
    %229 = vmatpush.msra.mxu0 %v112
    %230 = vmatpush.msra.mxu0 %v108
    %231 = vmatpush.msra.mxu0 %v104
    %232 = vmatpush.msra.mxu0 %v100
    %233 = vmatmul.f32.gmra.mxu0 %v143
    %v234 = vpop.f32.mrf.mxu0
    %v235 = vadd.f32 %v212, %v234
    %236 = vmatmul.f32.gmra.mxu0 %v146
    %v237 = vpop.f32.mrf.mxu0
    %v238 = vadd.f32 %v215, %v237
    %239 = vdwg.mxu0
    %240 = vmatpush.msra.mxu0 %v97
    %241 = vmatpush.msra.mxu0 %v93
    %242 = vmatpush.msra.mxu0 %v89
    %243 = vmatpush.msra.mxu0 %v85
    %244 = vmatpush.msra.mxu0 %v81
    %245 = vmatpush.msra.mxu0 %v77
    %246 = vmatpush.msra.mxu0 %v73
    %247 = vmatpush.msra.mxu0 %v69
    %248 = vmatpush.msra.mxu0 %v65
    %249 = vmatpush.msra.mxu0 %v61
    %250 = vmatpush.msra.mxu0 %v57
    %251 = vmatpush.msra.mxu0 %v53
    %252 = vmatpush.msra.mxu0 %v49
    %253 = vmatpush.msra.mxu0 %v45
    %254 = vmatpush.msra.mxu0 %v41
    %255 = vmatpush.msra.mxu0 %v37
    %256 = vmatmul.f32.gmra.mxu0 %v31
    %v257 = vpop.f32.mrf.mxu0
    %v258 = vadd.f32 %v135, %v257
    %259 = vmatmul.f32.gmra.mxu0 %v33
    %v260 = vpop.f32.mrf.mxu0
    %v261 = vadd.f32 %v135, %v260
    %262 = vdwg.mxu0
    %263 = vmatpush.msra.mxu0 0.0
    %264 = vmatpush.msra.mxu0 0.0
    %265 = vmatpush.msra.mxu0 0.0
    %266 = vmatpush.msra.mxu0 0.0
    %267 = vmatpush.msra.mxu0 0.0
    %268 = vmatpush.msra.mxu0 0.0
    %269 = vmatpush.msra.mxu0 0.0
    %270 = vmatpush.msra.mxu0 0.0
    %271 = vmatpush.msra.mxu0 %v129
    %272 = vmatpush.msra.mxu0 %v125
    %273 = vmatpush.msra.mxu0 %v121
    %274 = vmatpush.msra.mxu0 %v117
    %275 = vmatpush.msra.mxu0 %v113
    %276 = vmatpush.msra.mxu0 %v109
    %277 = vmatpush.msra.mxu0 %v105
    %278 = vmatpush.msra.mxu0 %v101
    %279 = vmatmul.f32.gmra.mxu0 %v143
    %v280 = vpop.f32.mrf.mxu0
    %v281 = vadd.f32 %v258, %v280
    %282 = vmatmul.f32.gmra.mxu0 %v146
    %v283 = vpop.f32.mrf.mxu0
    %v284 = vadd.f32 %v261, %v283
    %285 = vdwg.mxu0
    %286 = vmatpush.msra.mxu0 %v98
    %287 = vmatpush.msra.mxu0 %v94
    %288 = vmatpush.msra.mxu0 %v90
    %289 = vmatpush.msra.mxu0 %v86
    %290 = vmatpush.msra.mxu0 %v82
    %291 = vmatpush.msra.mxu0 %v78
    %292 = vmatpush.msra.mxu0 %v74
    %293 = vmatpush.msra.mxu0 %v70
    %294 = vmatpush.msra.mxu0 %v66
    %295 = vmatpush.msra.mxu0 %v62
    %296 = vmatpush.msra.mxu0 %v58
    %297 = vmatpush.msra.mxu0 %v54
    %298 = vmatpush.msra.mxu0 %v50
    %299 = vmatpush.msra.mxu0 %v46
    %300 = vmatpush.msra.mxu0 %v42
    %301 = vmatpush.msra.mxu0 %v38
    %302 = vmatmul.f32.gmra.mxu0 %v31
    %v303 = vpop.f32.mrf.mxu0
    %v304 = vadd.f32 %v136, %v303
    %305 = vmatmul.f32.gmra.mxu0 %v33
    %v306 = vpop.f32.mrf.mxu0
    %v307 = vadd.f32 %v136, %v306
    %308 = vdwg.mxu0
    %309 = vmatpush.msra.mxu0 0.0
    %310 = vmatpush.msra.mxu0 0.0
    %311 = vmatpush.msra.mxu0 0.0
    %312 = vmatpush.msra.mxu0 0.0
    %313 = vmatpush.msra.mxu0 0.0
    %314 = vmatpush.msra.mxu0 0.0
    %315 = vmatpush.msra.mxu0 0.0
    %316 = vmatpush.msra.mxu0 0.0
    %317 = vmatpush.msra.mxu0 %v130
    %318 = vmatpush.msra.mxu0 %v126
    %319 = vmatpush.msra.mxu0 %v122
    %320 = vmatpush.msra.mxu0 %v118
    %321 = vmatpush.msra.mxu0 %v114
    %322 = vmatpush.msra.mxu0 %v110
    %323 = vmatpush.msra.mxu0 %v106
    %324 = vmatpush.msra.mxu0 %v102
    %325 = vmatmul.f32.gmra.mxu0 %v143
    %v326 = vpop.f32.mrf.mxu0
    %v327 = vadd.f32 %v304, %v326
    %328 = vmatmul.f32.gmra.mxu0 %v146
    %v329 = vpop.f32.mrf.mxu0
    %v330 = vadd.f32 %v307, %v329
    %331 = vdwg.mxu0
    %332 = vst [vmem:[#allocation5] sm:$0xff] %v189
    %333 = vst [vmem:[#allocation5 + $0x8] sm:$0xff] %v235
    %334 = vst [vmem:[#allocation5 + $0x10] sm:$0xff] %v281
    %335 = vst [vmem:[#allocation5 + $0x18] sm:$0xff] %v327
    %336 = vst [vmem:[#allocation5 + $0x20] sm:$0xff] %v192
    %337 = vst [vmem:[#allocation5 + $0x28] sm:$0xff] %v238
    %338 = vst [vmem:[#allocation5 + $0x30] sm:$0xff] %v284
    %339 = vst [vmem:[#allocation5 + $0x38] sm:$0xff] %v330
    // Predicated region
    $region18: #{transformer_basic_head_forward.1} parent=1 // pred_check
      _
    $region19: #{transformer_basic_head_forward.1} parent=1 // pred_check_branch
      %341 = sbr.rel (0) target = $region21
    $region20: #{transformer_basic_head_forward.1} parent=1 // pred_region
      %343 = vsyncadd [#allocation4], 0
      %s344 = sshll.u32 [#allocation5], 4
      %s345 = int_to_ptr.vmem [resolvable:$true] %s344
      %s346 = sshll.u32 %s3, 4
      %s347 = int_to_ptr.hbm [resolvable:$true] %s346
      %352 = dma.vmem_to_hbm [thread:$0]  %s345, 1024, %s347, [#allocation4], 512, 512, 32
    $region21: #{transformer_basic_head_forward.1} parent=1 // pred_fallthru
      _
    // Predicated region
    $region22: #{transformer_basic_head_forward.1} parent=1 // pred_check
      _
    $region23: #{transformer_basic_head_forward.1} parent=1 // pred_check_branch
      %354 = sbr.rel (0) target = $region25
    $region24: #{transformer_basic_head_forward.1} parent=1 // pred_region
      %356 = dma.done [#allocation4], 1024
    $region25: #{transformer_basic_head_forward.1} parent=1 // pred_fallthru
      _
    %357 = vsyncpa [#allocation3], 1
    %358 = vsyncpa [#allocation4], 1

</llo_original>
